<compile_context>
chip_gen: v6e
topology: v6e:2x2x1
jax: 0.10.0
libtpu: 0.0.40
codegen_flags: <defaults>
</compile_context>

<pallas_src>
import functools

import jax
import jax.numpy as jnp
from jax.experimental import pallas as pl
from jax.experimental.pallas import tpu as pltpu

_LANES = 128
_MIN_PIPELINE_BYTES = 512 << 10   # below this: one block (pipelining buys nothing)
_MIN_BLOCKS = 4                   # above it: at least this many blocks so DMA/compute overlap


def _sublane_multiple(dtype) -> int:
    # f32 -> 8, bf16/f16 -> 16, int8/fp8 -> 32 (packed sublanes).
    itemsize = jnp.dtype(dtype).itemsize
    return max(8, 32 // max(itemsize, 1))


@functools.lru_cache(maxsize=1)
def _block_bytes_for_device() -> int:
    """Generation-aware input-block size (bytes)."""
    try:
        kind = jax.devices()[0].device_kind.lower()
    except Exception:
        return 2 << 20
    if "v6" in kind or "v7" in kind:
        # 4 MiB blocks: 2x(in+out) = 16 MiB, under the 32 MiB scoped-VMEM default
        # (and under v7x's 64 MiB physical VMEM).
        return 4 << 20
    # v5e and older / unknown: 2 MiB blocks -> 8 MiB double-buffered, under the 16 MiB default.
    return 2 << 20


def _act_quant_kernel(x_ref, o_ref, *, a_bit: int):
    # Compute in f32 regardless of storage dtype; cast back on store.
    x = x_ref[...].astype(jnp.float32)
    xc = jnp.clip(x, 0.0, 1.0)
    if a_bit == 1:
        # After clip to [0,1], sign()/abs() are redundant: floor(x + 0.5) is enough.
        q = jnp.floor(xc + 0.5)
    else:
        n = float(2 ** a_bit - 1)
        # Reciprocal multiply instead of divide (1-ulp vs the literal torch division).
        q = jnp.round(xc * n) * jnp.float32(1.0 / n)
    o_ref[...] = q.astype(o_ref.dtype)


def _cost(total_elems: int, itemsize: int) -> pl.CostEstimate:
    return pl.CostEstimate(flops=5 * total_elems, transcendentals=0,
                           bytes_accessed=2 * total_elems * itemsize)


def _quantize_2d(x2d: jax.Array, a_bit: int, block_bytes: int) -> jax.Array:
    """Lane-aligned path: x viewed as (rows, 128)."""
    rows, lanes = x2d.shape
    dtype = x2d.dtype
    itemsize = jnp.dtype(dtype).itemsize
    sub = _sublane_multiple(dtype)
    total_bytes = rows * lanes * itemsize

    max_tile_rows = max(sub, (block_bytes // (lanes * itemsize)) // sub * sub)
    if total_bytes <= _MIN_PIPELINE_BYTES or rows <= sub:
        tile_rows = rows                      # single full block (always legal)
    else:
        # Split into >= _MIN_BLOCKS blocks so in-DMA / compute / out-DMA overlap.
        quarter = max(sub, (rows // _MIN_BLOCKS) // sub * sub)
        tile_rows = min(max_tile_rows, quarter)
    grid = (pl.cdiv(rows, tile_rows),)        # ragged last block masked by Pallas

    return pl.pallas_call(
        functools.partial(_act_quant_kernel, a_bit=a_bit),
        out_shape=jax.ShapeDtypeStruct((rows, lanes), dtype),
        grid=grid,
        in_specs=[pl.BlockSpec((tile_rows, lanes), lambda i: (i, 0))],
        out_specs=pl.BlockSpec((tile_rows, lanes), lambda i: (i, 0)),
        compiler_params=pltpu.CompilerParams(
            dimension_semantics=("parallel",),   # shards the stream across both TCs on v7x
        ),
        cost_estimate=_cost(rows * lanes, itemsize),
    )(x2d)


def _quantize_1d(x1d: jax.Array, a_bit: int, block_bytes: int) -> jax.Array:
    """Ragged path (size not a multiple of 128): one 1-D blocked pass, masked last block."""
    (total,) = x1d.shape
    dtype = x1d.dtype
    itemsize = jnp.dtype(dtype).itemsize
    chunk = _sublane_multiple(dtype) * _LANES   # aligned 1-D block granule
    total_bytes = total * itemsize

    max_block = max(chunk, (block_bytes // itemsize) // chunk * chunk)
    if total_bytes <= _MIN_PIPELINE_BYTES or total <= chunk:
        block = total                           # single full block (always legal)
    else:
        quarter = max(chunk, (total // _MIN_BLOCKS) // chunk * chunk)
        block = min(max_block, quarter)
    grid = (pl.cdiv(total, block),)             # ragged last block masked by Pallas

    return pl.pallas_call(
        functools.partial(_act_quant_kernel, a_bit=a_bit),
        out_shape=jax.ShapeDtypeStruct((total,), dtype),
        grid=grid,
        in_specs=[pl.BlockSpec((block,), lambda i: (i,))],
        out_specs=pl.BlockSpec((block,), lambda i: (i,)),
        compiler_params=pltpu.CompilerParams(
            dimension_semantics=("parallel",),
        ),
        cost_estimate=_cost(total, itemsize),
    )(x1d)


def activation_quantize(x: jax.Array, a_bit: int) -> jax.Array:
    """Forward pass of activation_quantize_fn as a Pallas TPU kernel."""
    assert a_bit <= 8 or a_bit == 32

    if a_bit == 32:
        return x  # identity: skip kernel launch and HBM pass entirely

    total = x.size
    if total == 0:
        return x

    block_bytes = _block_bytes_for_device()
    orig_shape = x.shape
    x_flat = x.reshape(-1)

    if total % _LANES == 0:
        out = _quantize_2d(x_flat.reshape(total // _LANES, _LANES), a_bit, block_bytes)
    else:
        out = _quantize_1d(x_flat, a_bit, block_bytes)
    return out.reshape(orig_shape)

    # TODO(synk): backward (straight-through estimator) is an autograd rule, not part of the
    # forward pass; attach via jax.custom_vjp if gradients through this op are needed.


def _reference(x, a_bit):
    # Literal translation of the PyTorch module semantics.
    if a_bit == 32:
        return x
    xc = jnp.clip(x, 0.0, 1.0)
    if a_bit == 1:
        return jnp.sign(xc) * jnp.floor(jnp.abs(xc) + 0.5)
    n = float(2 ** a_bit - 1)
    return jnp.round(xc * n) / n


if __name__ == "__main__":
    key = jax.random.PRNGKey(0)
    k1, k2, k3, k4 = jax.random.split(key, 4)

    # Values span negative / in-range / >1 to exercise the clamp.
    x_small = jax.random.normal(k1, (2, 4, 16, 16), dtype=jnp.float32) * 1.5   # aligned, 1 block
    x_mid = jax.random.normal(k2, (4, 64, 32, 32), dtype=jnp.float32) * 1.5    # aligned, pipelined
    x_rag_small = jax.random.normal(k3, (3, 5, 7), dtype=jnp.float32) * 1.5    # ragged, 1-D 1 block
    x_rag_mid = jax.random.normal(k4, (257, 515), dtype=jnp.float32) * 1.5     # ragged, 1-D masked

    ok = True
    for a_bit in (1, 2, 4, 8, 32):
        for inp in (x_small, x_mid, x_rag_small, x_rag_mid):
            out = activation_quantize(inp, a_bit)
            out = jax.block_until_ready(out)
            ref = _reference(inp, a_bit)
            if not jnp.allclose(out, ref, atol=1e-6, rtol=1e-6):
                ok = False
                print(f"MISMATCH for a_bit={a_bit}, shape={inp.shape}")

    if ok:
        print("KERNEL_OK")
</pallas_src>

<mosaic_0001>
module attributes {stable_mosaic.version = 11 : i64} {
  func.func @_act_quant_kernel(%arg0: i32, %arg1: memref<16x128xf32, #tpu.memory_space<vmem>>, %arg2: memref<16x128xf32, #tpu.memory_space<vmem>>) attributes {dimension_semantics = [#tpu.dimension_semantics<parallel>], iteration_bounds = array<i64: 1>, scalar_prefetch = 0 : i64, scratch_operands = 0 : i64, tpu.core_type = #tpu.core_type<tc>, window_params = [{transform_indices = @transform_0, window_bounds = array<i64: 16, 128>}, {transform_indices = @transform_1, window_bounds = array<i64: 16, 128>}]} {
    %c0 = arith.constant 0 : index
    %c0_0 = arith.constant 0 : index
    %0 = vector.load %arg1[%c0, %c0_0] : memref<16x128xf32, #tpu.memory_space<vmem>>, vector<16x128xf32>
    %cst = arith.constant 0.000000e+00 : f32
    %cst_1 = arith.constant 1.000000e+00 : f32
    %1 = vector.broadcast %cst : f32 to vector<16x128xf32>
    %2 = arith.maximumf %1, %0 : vector<16x128xf32>
    %3 = vector.broadcast %cst_1 : f32 to vector<16x128xf32>
    %4 = arith.minimumf %3, %2 : vector<16x128xf32>
    %cst_2 = arith.constant 5.000000e-01 : f32
    %5 = vector.broadcast %cst_2 : f32 to vector<16x128xf32>
    %6 = arith.addf %4, %5 : vector<16x128xf32>
    %7 = math.floor %6 : vector<16x128xf32>
    %c0_3 = arith.constant 0 : index
    %c0_4 = arith.constant 0 : index
    %8 = vector.load %arg2[%c0_3, %c0_4] : memref<16x128xf32, #tpu.memory_space<vmem>>, vector<16x128xf32>
    tpu.vector_store %arg2[%c0_3, %c0_4], %7 {strides = array<i32>} : memref<16x128xf32, #tpu.memory_space<vmem>>, vector<16x128xf32>,
    return
  }
  func.func @transform_0(%arg0: i32) -> (i32, i32) {
    %c0_i32 = arith.constant 0 : i32
    %c0_i32_0 = arith.constant 0 : i32
    return %arg0, %c0_i32 : i32, i32
  }
  func.func @transform_1(%arg0: i32) -> (i32, i32) {
    %c0_i32 = arith.constant 0 : i32
    %c0_i32_0 = arith.constant 0 : i32
    return %arg0, %c0_i32 : i32, i32
  }
}

</mosaic_0001>

<llo_original>
// kernel: tpu_custom_call.1
$region0: #{tpu_custom_call.1}
  #allocation0 [shape = 'u32[]', space=smem, size = 0x4, offset = 0x4, fixed_abs, tag = 'smem constant byte address 0x4 - core index']
  #allocation1 [shape = 'u32[144,128]{1,0:T(1,128)}', space=vmem, size = 0x12000, scoped, tag = 'internal scratch']
  %s0 = inlined_call_operand.hbm [shape: f32[16,128], index: 0, kind: input, shape index: {}]
  %s1 = inlined_call_operand.hbm [shape: f32[16,128], index: 1, kind: output, shape index: {}]
  %s2 = sld [smem:[#allocation0]]
  $region18: #{tpu_custom_call.1} parent=0
    _
  %s4 = ssub.s32 1, %s2
  %s5 = scalar_select 0, %s4, %s2
  $region1: #{tpu_custom_call.1} parent=0
    #allocation2 [shape = 'u8[8192]{0}', space=vmem, size = 0x2000, scoped, tag = 'input window, operand 0, single buffered']
    #allocation3 [shape = 's32[1]{0}', space=sflag, size = 0x4, scoped, tag = 'scoped memory for tpu_custom_call.1']
    #allocation4 [shape = 's32[1]{0}', space=sflag, size = 0x4, scoped, tag = 'scoped memory for tpu_custom_call.1']
    #allocation5 [shape = 'u8[8192]{0}', space=vmem, size = 0x2000, scoped, tag = 'output window, operand 0, single buffered']
    %6 = vsyncpa [#allocation3], 0
    %7 = vsyncpa [#allocation4], 0
    // Predicated region
    $region2: #{tpu_custom_call.1} parent=1 // pred_check
      _
    $region3: #{tpu_custom_call.1} parent=1 // pred_check_branch
      %9 = sbr.rel (0) target = $region5
    $region4: #{tpu_custom_call.1} parent=1 // pred_region
      %s11 = ssub.s32 256, 256
      %12 = vsyncadd [#allocation3], %s11
      %s13 = sshll.u32 [#allocation2], 4
      %s14 = int_to_ptr.vmem [resolvable:$true] %s13
      %19 = dma.hbm_to_vmem [thread:$0]  %s0, 256, %s14, [#allocation3], 128, 128, 8
    $region5: #{tpu_custom_call.1} parent=1 // pred_fallthru
      _
    // Predicated region
    $region6: #{tpu_custom_call.1} parent=1 // pred_check
      _
    $region7: #{tpu_custom_call.1} parent=1 // pred_check_branch
      %21 = sbr.rel (0) target = $region9
    $region8: #{tpu_custom_call.1} parent=1 // pred_region
      %22 = dma.done [#allocation3], 256
    $region9: #{tpu_custom_call.1} parent=1 // pred_fallthru
      _
    %v23 = vld [vmem:[#allocation2] sm:$0xff]
    %v24 = vld [vmem:[#allocation2 + $0x8] sm:$0xff]
    %v25 = vmax.f32 %v23, 0.0
    %v26 = vmax.f32 %v24, 0.0
    %v27 = vmin.f32 %v25, 1.0
    %v28 = vmin.f32 %v26, 1.0
    %v29 = vadd.f32 %v27, 0.5
    %v30 = vadd.f32 %v28, 0.5
    %v31 = vfloor.f32 %v29
    %v32 = vfloor.f32 %v30
    %33 = vst [vmem:[#allocation5] sm:$0xff] %v31
    %34 = vst [vmem:[#allocation5 + $0x8] sm:$0xff] %v32
    // Predicated region
    $region10: #{tpu_custom_call.1} parent=1 // pred_check
      _
    $region11: #{tpu_custom_call.1} parent=1 // pred_check_branch
      %36 = sbr.rel (0) target = $region13
    $region12: #{tpu_custom_call.1} parent=1 // pred_region
      %s38 = ssub.s32 256, 256
      %39 = vsyncadd [#allocation4], %s38
      %s40 = sshll.u32 [#allocation5], 4
      %s41 = int_to_ptr.vmem [resolvable:$true] %s40
      %46 = dma.vmem_to_hbm [thread:$0]  %s41, 256, %s1, [#allocation4], 128, 128, 8
    $region13: #{tpu_custom_call.1} parent=1 // pred_fallthru
      _
    // Predicated region
    $region14: #{tpu_custom_call.1} parent=1 // pred_check
      _
    $region15: #{tpu_custom_call.1} parent=1 // pred_check_branch
      %48 = sbr.rel (0) target = $region17
    $region16: #{tpu_custom_call.1} parent=1 // pred_region
      %49 = dma.done [#allocation4], 256
    $region17: #{tpu_custom_call.1} parent=1 // pred_fallthru
      _
    %50 = vsyncpa [#allocation3], 1
    %51 = vsyncpa [#allocation4], 1

</llo_original>
